<compile_context>
chip_gen: v6e
topology: v6e:2x2x1
jax: 0.10.0
libtpu: 0.0.40
codegen_flags: <defaults>
</compile_context>

<pallas_src>
import functools

import jax
import jax.numpy as jnp
from jax.experimental import pallas as pl
from jax.experimental.pallas import tpu as pltpu


def _silu(x):
    return x * jax.nn.sigmoid(x)


def _sinusoidal_features(t, dim):
    """Standard sinusoidal time featurization -> (B, dim)."""
    half = dim // 2
    freqs = jnp.exp(-jnp.log(10000.0) * jnp.arange(half, dtype=jnp.float32) / half)
    args = t.astype(jnp.float32)[:, None] * freqs[None, :]
    return jnp.concatenate([jnp.cos(args), jnp.sin(args)], axis=-1)


# -----------------------------------------------------------------------------
# Kernels
# -----------------------------------------------------------------------------

def _small_c_mix_kernel(w_ref, b_ref, x_ref, o_ref, *, batch, channels):
    """Tiny-C path: VPU broadcast-FMAs with SMEM scalar weights.

    w_ref: (B*C*C,) SMEM  flattened W_eff[b, c_out, c_in]
    b_ref: (B*C,)   SMEM  flattened b_eff[b, c_out]
    x_ref: (B*C, NT) VMEM row b*C + c_in  holds x[b, c_in, :]   (spatial on lanes)
    o_ref: (B*C, NT) VMEM row b*C + c_out holds out[b, c_out, :]
    """
    x = x_ref[...]                                           # (B*C, NT) f32
    rows = []
    for b in range(batch):
        base = b * channels
        for c in range(channels):
            wrow = (base + c) * channels                     # start of W_eff[b, c, :]
            acc = b_ref[base + c] + w_ref[wrow] * x[base:base + 1, :]
            for cp in range(1, channels):
                acc = acc + w_ref[wrow + cp] * x[base + cp:base + cp + 1, :]
            rows.append(acc)
    # Coalesced output: one unmasked, lane- and sublane-dense full-tile store.
    o_ref[...] = jnp.concatenate(rows, axis=0).astype(o_ref.dtype)


def _mxu_mix_kernel(w_ref, b_ref, x_ref, o_ref):
    """Realistic-C path: per-batch channel mix on the MXU.

    w_ref: (B, C, C)  VMEM  W_eff[b, c_out, c_in]  (resident across grid)
    b_ref: (B, C, 1)  VMEM  b_eff                   (resident across grid)
    x_ref: (B, C, NT) VMEM  input slab, spatial on lanes
    o_ref: (B, C, NT) VMEM
    """
    out = jnp.einsum("bck,bkn->bcn", w_ref[...], x_ref[...],
                     preferred_element_type=jnp.float32)
    o_ref[...] = (out + b_ref[...]).astype(o_ref.dtype)


# -----------------------------------------------------------------------------
# Tiling helpers
# -----------------------------------------------------------------------------

def _vmem_budgets():
    """(tile_budget, vmem_limit) bytes derived from this chip's VMEM capacity.

    v5e/v6e (128 MiB): ~76 MiB of double-buffered blocks, 96 MiB scoped limit.
    v7x    ( 64 MiB): ~38 MiB of double-buffered blocks, 48 MiB scoped limit.
    """
    cap = 64 * 1024 * 1024
    try:
        info = pltpu.get_tpu_info()
        cap = int(getattr(info, "vmem_capacity_bytes", cap) or cap)
    except Exception:
        pass
    return int(cap * 0.6), int(cap * 0.75)


def _choose_n_tile(N, rows, itemsize, tile_budget, min_steps=2):
    """Largest 128-lane-aligned spatial tile whose double-buffered (in + out)
    blocks fit `tile_budget`.  Aims for >= `min_steps` grid steps so the
    'parallel' grid axis can be sharded across both v7x TensorCores."""
    if N <= 128:
        return N
    per_lane = 4 * rows * itemsize                      # 2 bufs x (in + out)
    budget_lanes = max(1, tile_budget // per_lane)
    step_lanes = pl.cdiv(N, max(1, min_steps))
    tile = min(budget_lanes, step_lanes, N)
    return max(128, (tile // 128) * 128)                # never exceeds budget for tile>=128


# -----------------------------------------------------------------------------
# Forward
# -----------------------------------------------------------------------------

def embedding_wrapper_forward(x_t, t, params, label=None):
    """x_t: (B, C, H, W) NCHW float32; t: (B,) float32; label: (B,) int32 or None."""
    B, C, H, W = x_t.shape
    E = params["w1"].shape[0]
    N = H * W

    # ---- hoisted per-batch scalar path (plain JAX, tiny row-matmul chain) ----
    tfeat = _sinusoidal_features(t, E)                              # (B, E)
    h = _silu(tfeat @ params["w1"] + params["b1"])                  # (B, Eh)
    temb = h @ params["w2"] + params["b2"]                          # (B, E)
    if label is None:
        emb = temb                                                  # no zero-lemb DMA
    else:
        emb = temb + jnp.take(params["label_table"], label, axis=0)
    mod = emb @ params["wmod"] + params["bmod"]                     # (B, 2C)
    scale, shift = mod[:, :C], mod[:, C:]                           # (B, C) each

    # Fold AdaLN modulation into per-batch effective mix weights:
    #   out[b, n, c] = sum_cp x[b, n, cp] * W_eff[b, c, cp] + b_eff[b, c]
    wout = params["wout"].astype(jnp.float32)                       # (C_in, C_out)
    bout = params["bout"].reshape(-1).astype(jnp.float32)           # (C_out,)
    w_eff = jnp.swapaxes(wout[None] * (1.0 + scale)[:, :, None], 1, 2)  # (B, C_out, C_in)
    b_eff = bout[None, :] + shift @ wout                            # (B, C_out)

    tile_budget, vmem_limit = _vmem_budgets()
    compiler_params = pltpu.CompilerParams(
        dimension_semantics=("parallel",),        # N-tile axis, megacore-shardable
        vmem_limit_bytes=vmem_limit,
    )
    # TODO(synk): at realistic sizes stream x/out in bf16 (cast in the wrapper,
    # f32 accumulation in-kernel) -- the kernel is HBM-bound so that is ~2x.

    if C <= 8:
        # --- tiny-C path: sublane-pack (B*C, N); SMEM scalar weights; VPU FMAs ---
        rows = B * C
        x2d = x_t.reshape(rows, N)                                  # free NCHW reshape
        n_tile = _choose_n_tile(N, rows, x2d.dtype.itemsize, tile_budget)
        grid = (pl.cdiv(N, n_tile),)
        kernel = functools.partial(_small_c_mix_kernel, batch=B, channels=C)
        out2d = pl.pallas_call(
            kernel,
            out_shape=jax.ShapeDtypeStruct((rows, N), x_t.dtype),
            grid_spec=pltpu.PrefetchScalarGridSpec(
                num_scalar_prefetch=0,
                grid=grid,
                in_specs=[
                    pl.BlockSpec(memory_space=pltpu.MemorySpace.SMEM),   # W_eff flat
                    pl.BlockSpec(memory_space=pltpu.MemorySpace.SMEM),   # b_eff flat
                    pl.BlockSpec((rows, n_tile), lambda n: (0, n)),      # x slab
                ],
                out_specs=pl.BlockSpec((rows, n_tile), lambda n: (0, n)),
            ),
            compiler_params=compiler_params,
        )(w_eff.reshape(-1), b_eff.reshape(-1), x2d)
        return out2d.reshape(B, C, H, W)

    # --- realistic-C path: channel mix on the MXU, weights resident in VMEM ---
    x_bcn = x_t.reshape(B, C, N)                                    # free NCHW reshape
    resident = 2 * (B * C * C + B * C) * 4                          # W_eff + b_eff blocks
    n_tile = _choose_n_tile(N, B * C, x_bcn.dtype.itemsize,
                            max(tile_budget - resident, 4 * 1024 * 1024))
    grid = (pl.cdiv(N, n_tile),)
    out_bcn = pl.pallas_call(
        _mxu_mix_kernel,
        out_shape=jax.ShapeDtypeStruct((B, C, N), x_t.dtype),
        grid_spec=pltpu.PrefetchScalarGridSpec(
            num_scalar_prefetch=0,
            grid=grid,
            in_specs=[
                pl.BlockSpec((B, C, C), lambda n: (0, 0, 0)),        # W_eff (resident)
                pl.BlockSpec((B, C, 1), lambda n: (0, 0, 0)),        # b_eff (resident)
                pl.BlockSpec((B, C, n_tile), lambda n: (0, 0, n)),   # x slab
            ],
            out_specs=pl.BlockSpec((B, C, n_tile), lambda n: (0, 0, n)),
        ),
        compiler_params=compiler_params,
    )(w_eff, b_eff.reshape(B, C, 1), x_bcn)
    return out_bcn.reshape(B, C, H, W)


# -----------------------------------------------------------------------------
# Reference & params
# -----------------------------------------------------------------------------

def _reference_forward(x_t, t, params, label=None):
    """Pure-JAX reference matching the PyTorch module semantics."""
    B, C, H, W = x_t.shape
    E = params["w1"].shape[0]
    tfeat = _sinusoidal_features(t, E)
    h = _silu(tfeat @ params["w1"] + params["b1"])
    temb = h @ params["w2"] + params["b2"]
    if label is None:
        emb = temb
    else:
        emb = temb + jnp.take(params["label_table"], label, axis=0)
    mod = emb @ params["wmod"] + params["bmod"]
    scale, shift = mod[:, :C], mod[:, C:]
    x = jnp.transpose(x_t, (0, 2, 3, 1)).reshape(B, H * W, C)
    y = x * (1.0 + scale[:, None, :]) + shift[:, None, :]
    out = y @ params["wout"] + params["bout"]
    return jnp.transpose(out.reshape(B, H, W, C), (0, 3, 1, 2))


def _init_params(key, C, E, Eh, num_classes):
    ks = jax.random.split(key, 9)
    s = lambda fan_in: 1.0 / jnp.sqrt(jnp.float32(fan_in))
    return {
        "w1":   jax.random.normal(ks[0], (E, Eh), jnp.float32) * s(E),
        "b1":   jax.random.normal(ks[1], (1, Eh), jnp.float32) * 0.1,
        "w2":   jax.random.normal(ks[2], (Eh, E), jnp.float32) * s(Eh),
        "b2":   jax.random.normal(ks[3], (1, E), jnp.float32) * 0.1,
        "wmod": jax.random.normal(ks[4], (E, 2 * C), jnp.float32) * s(E),
        "bmod": jax.random.normal(ks[5], (1, 2 * C), jnp.float32) * 0.1,
        "wout": jax.random.normal(ks[6], (C, C), jnp.float32) * s(C),
        "bout": jax.random.normal(ks[7], (1, C), jnp.float32) * 0.1,
        "label_table": jax.random.normal(ks[8], (num_classes, E), jnp.float32),
    }


if __name__ == "__main__":
    # Keep wrapper/reference matmuls in full f32 so tolerance isn't dominated by
    # default bf16 matmul precision on TPU.
    jax.config.update("jax_default_matmul_precision", "highest")

    key = jax.random.PRNGKey(0)

    # --- tiny-C shape (exercises the sublane-packed VPU/SMEM path) ---
    B, C, H, W = 2, 4, 16, 16
    E, Eh = 32, 64
    k_x, k_t, k_l, k_p, key = jax.random.split(key, 5)
    x_t = jax.random.normal(k_x, (B, C, H, W), jnp.float32)      # NCHW like PyTorch
    t = jax.random.uniform(k_t, (B,), jnp.float32)
    label = jax.random.randint(k_l, (B,), 0, 10, jnp.int32)
    params = _init_params(k_p, C, E, Eh, num_classes=10)

    # With label (time + label embedding branch)
    out = jax.block_until_ready(embedding_wrapper_forward(x_t, t, params, label=label))
    ref = _reference_forward(x_t, t, params, label=label)
    assert out.shape == (B, C, H, W)
    assert jnp.allclose(out, ref, atol=1e-4, rtol=1e-4), "mismatch (label branch)"

    # Without label (label is None branch)
    out_nl = jax.block_until_ready(embedding_wrapper_forward(x_t, t, params, label=None))
    ref_nl = _reference_forward(x_t, t, params, label=None)
    assert jnp.allclose(out_nl, ref_nl, atol=1e-4, rtol=1e-4), "mismatch (no-label branch)"

    # --- wider-C shape (exercises the MXU channel-mix path used at realistic C) ---
    B2, C2 = 2, 64
    k_x2, k_t2, k_l2, k_p2, key = jax.random.split(key, 5)
    x2 = jax.random.normal(k_x2, (B2, C2, H, W), jnp.float32)
    t2 = jax.random.uniform(k_t2, (B2,), jnp.float32)
    label2 = jax.random.randint(k_l2, (B2,), 0, 10, jnp.int32)
    params2 = _init_params(k_p2, C2, E, Eh, num_classes=10)
    out2 = jax.block_until_ready(embedding_wrapper_forward(x2, t2, params2, label=label2))
    ref2 = _reference_forward(x2, t2, params2, label=label2)
    assert out2.shape == (B2, C2, H, W)
    assert jnp.allclose(out2, ref2, atol=2e-3, rtol=2e-3), "mismatch (MXU path)"

    print("KERNEL_OK")
</pallas_src>

<mosaic_0001>
module attributes {stable_mosaic.version = 11 : i64} {
  func.func @_small_c_mix_kernel(%arg0: i32, %arg1: memref<32xf32, #tpu.memory_space<smem>>, %arg2: memref<8xf32, #tpu.memory_space<smem>>, %arg3: memref<8x128xf32, #tpu.memory_space<vmem>>, %arg4: memref<8x128xf32, #tpu.memory_space<vmem>>) attributes {dimension_semantics = [#tpu.dimension_semantics<parallel>], iteration_bounds = array<i64: 2>, scalar_prefetch = 0 : i64, scratch_operands = 0 : i64, tpu.core_type = #tpu.core_type<tc>, window_params = [{transform_indices = @transform_0, window_bounds = array<i64: 32>}, {transform_indices = @transform_1, window_bounds = array<i64: 8>}, {transform_indices = @transform_2, window_bounds = array<i64: 8, 128>}, {transform_indices = @transform_3, window_bounds = array<i64: 8, 128>}]} {
    %c0 = arith.constant 0 : index
    %c0_0 = arith.constant 0 : index
    %0 = vector.load %arg3[%c0, %c0_0] : memref<8x128xf32, #tpu.memory_space<vmem>>, vector<8x128xf32>
    %c0_1 = arith.constant 0 : index
    %1 = memref.load %arg2[%c0_1] : memref<8xf32, #tpu.memory_space<smem>>
    %c0_2 = arith.constant 0 : index
    %2 = memref.load %arg1[%c0_2] : memref<32xf32, #tpu.memory_space<smem>>
    %3 = vector.extract_strided_slice %0 {offsets = [0, 0], sizes = [1, 128], strides = [1, 1]} : vector<8x128xf32> to vector<1x128xf32>
    %4 = vector.broadcast %2 : f32 to vector<1x128xf32>
    %5 = arith.mulf %4, %3 : vector<1x128xf32>
    %6 = vector.broadcast %1 : f32 to vector<1x128xf32>
    %7 = arith.addf %6, %5 : vector<1x128xf32>
    %c1 = arith.constant 1 : index
    %8 = memref.load %arg1[%c1] : memref<32xf32, #tpu.memory_space<smem>>
    %9 = vector.extract_strided_slice %0 {offsets = [1, 0], sizes = [1, 128], strides = [1, 1]} : vector<8x128xf32> to vector<1x128xf32>
    %10 = vector.broadcast %8 : f32 to vector<1x128xf32>
    %11 = arith.mulf %10, %9 : vector<1x128xf32>
    %12 = arith.addf %7, %11 : vector<1x128xf32>
    %c2 = arith.constant 2 : index
    %13 = memref.load %arg1[%c2] : memref<32xf32, #tpu.memory_space<smem>>
    %14 = vector.extract_strided_slice %0 {offsets = [2, 0], sizes = [1, 128], strides = [1, 1]} : vector<8x128xf32> to vector<1x128xf32>
    %15 = vector.broadcast %13 : f32 to vector<1x128xf32>
    %16 = arith.mulf %15, %14 : vector<1x128xf32>
    %17 = arith.addf %12, %16 : vector<1x128xf32>
    %c3 = arith.constant 3 : index
    %18 = memref.load %arg1[%c3] : memref<32xf32, #tpu.memory_space<smem>>
    %19 = vector.extract_strided_slice %0 {offsets = [3, 0], sizes = [1, 128], strides = [1, 1]} : vector<8x128xf32> to vector<1x128xf32>
    %20 = vector.broadcast %18 : f32 to vector<1x128xf32>
    %21 = arith.mulf %20, %19 : vector<1x128xf32>
    %22 = arith.addf %17, %21 : vector<1x128xf32>
    %c1_3 = arith.constant 1 : index
    %23 = memref.load %arg2[%c1_3] : memref<8xf32, #tpu.memory_space<smem>>
    %c4 = arith.constant 4 : index
    %24 = memref.load %arg1[%c4] : memref<32xf32, #tpu.memory_space<smem>>
    %25 = vector.extract_strided_slice %0 {offsets = [0, 0], sizes = [1, 128], strides = [1, 1]} : vector<8x128xf32> to vector<1x128xf32>
    %26 = vector.broadcast %24 : f32 to vector<1x128xf32>
    %27 = arith.mulf %26, %25 : vector<1x128xf32>
    %28 = vector.broadcast %23 : f32 to vector<1x128xf32>
    %29 = arith.addf %28, %27 : vector<1x128xf32>
    %c5 = arith.constant 5 : index
    %30 = memref.load %arg1[%c5] : memref<32xf32, #tpu.memory_space<smem>>
    %31 = vector.extract_strided_slice %0 {offsets = [1, 0], sizes = [1, 128], strides = [1, 1]} : vector<8x128xf32> to vector<1x128xf32>
    %32 = vector.broadcast %30 : f32 to vector<1x128xf32>
    %33 = arith.mulf %32, %31 : vector<1x128xf32>
    %34 = arith.addf %29, %33 : vector<1x128xf32>
    %c6 = arith.constant 6 : index
    %35 = memref.load %arg1[%c6] : memref<32xf32, #tpu.memory_space<smem>>
    %36 = vector.extract_strided_slice %0 {offsets = [2, 0], sizes = [1, 128], strides = [1, 1]} : vector<8x128xf32> to vector<1x128xf32>
    %37 = vector.broadcast %35 : f32 to vector<1x128xf32>
    %38 = arith.mulf %37, %36 : vector<1x128xf32>
    %39 = arith.addf %34, %38 : vector<1x128xf32>
    %c7 = arith.constant 7 : index
    %40 = memref.load %arg1[%c7] : memref<32xf32, #tpu.memory_space<smem>>
    %41 = vector.extract_strided_slice %0 {offsets = [3, 0], sizes = [1, 128], strides = [1, 1]} : vector<8x128xf32> to vector<1x128xf32>
    %42 = vector.broadcast %40 : f32 to vector<1x128xf32>
    %43 = arith.mulf %42, %41 : vector<1x128xf32>
    %44 = arith.addf %39, %43 : vector<1x128xf32>
    %c2_4 = arith.constant 2 : index
    %45 = memref.load %arg2[%c2_4] : memref<8xf32, #tpu.memory_space<smem>>
    %c8 = arith.constant 8 : index
    %46 = memref.load %arg1[%c8] : memref<32xf32, #tpu.memory_space<smem>>
    %47 = vector.extract_strided_slice %0 {offsets = [0, 0], sizes = [1, 128], strides = [1, 1]} : vector<8x128xf32> to vector<1x128xf32>
    %48 = vector.broadcast %46 : f32 to vector<1x128xf32>
    %49 = arith.mulf %48, %47 : vector<1x128xf32>
    %50 = vector.broadcast %45 : f32 to vector<1x128xf32>
    %51 = arith.addf %50, %49 : vector<1x128xf32>
    %c9 = arith.constant 9 : index
    %52 = memref.load %arg1[%c9] : memref<32xf32, #tpu.memory_space<smem>>
    %53 = vector.extract_strided_slice %0 {offsets = [1, 0], sizes = [1, 128], strides = [1, 1]} : vector<8x128xf32> to vector<1x128xf32>
    %54 = vector.broadcast %52 : f32 to vector<1x128xf32>
    %55 = arith.mulf %54, %53 : vector<1x128xf32>
    %56 = arith.addf %51, %55 : vector<1x128xf32>
    %c10 = arith.constant 10 : index
    %57 = memref.load %arg1[%c10] : memref<32xf32, #tpu.memory_space<smem>>
    %58 = vector.extract_strided_slice %0 {offsets = [2, 0], sizes = [1, 128], strides = [1, 1]} : vector<8x128xf32> to vector<1x128xf32>
    %59 = vector.broadcast %57 : f32 to vector<1x128xf32>
    %60 = arith.mulf %59, %58 : vector<1x128xf32>
    %61 = arith.addf %56, %60 : vector<1x128xf32>
    %c11 = arith.constant 11 : index
    %62 = memref.load %arg1[%c11] : memref<32xf32, #tpu.memory_space<smem>>
    %63 = vector.extract_strided_slice %0 {offsets = [3, 0], sizes = [1, 128], strides = [1, 1]} : vector<8x128xf32> to vector<1x128xf32>
    %64 = vector.broadcast %62 : f32 to vector<1x128xf32>
    %65 = arith.mulf %64, %63 : vector<1x128xf32>
    %66 = arith.addf %61, %65 : vector<1x128xf32>
    %c3_5 = arith.constant 3 : index
    %67 = memref.load %arg2[%c3_5] : memref<8xf32, #tpu.memory_space<smem>>
    %c12 = arith.constant 12 : index
    %68 = memref.load %arg1[%c12] : memref<32xf32, #tpu.memory_space<smem>>
    %69 = vector.extract_strided_slice %0 {offsets = [0, 0], sizes = [1, 128], strides = [1, 1]} : vector<8x128xf32> to vector<1x128xf32>
    %70 = vector.broadcast %68 : f32 to vector<1x128xf32>
    %71 = arith.mulf %70, %69 : vector<1x128xf32>
    %72 = vector.broadcast %67 : f32 to vector<1x128xf32>
    %73 = arith.addf %72, %71 : vector<1x128xf32>
    %c13 = arith.constant 13 : index
    %74 = memref.load %arg1[%c13] : memref<32xf32, #tpu.memory_space<smem>>
    %75 = vector.extract_strided_slice %0 {offsets = [1, 0], sizes = [1, 128], strides = [1, 1]} : vector<8x128xf32> to vector<1x128xf32>
    %76 = vector.broadcast %74 : f32 to vector<1x128xf32>
    %77 = arith.mulf %76, %75 : vector<1x128xf32>
    %78 = arith.addf %73, %77 : vector<1x128xf32>
    %c14 = arith.constant 14 : index
    %79 = memref.load %arg1[%c14] : memref<32xf32, #tpu.memory_space<smem>>
    %80 = vector.extract_strided_slice %0 {offsets = [2, 0], sizes = [1, 128], strides = [1, 1]} : vector<8x128xf32> to vector<1x128xf32>
    %81 = vector.broadcast %79 : f32 to vector<1x128xf32>
    %82 = arith.mulf %81, %80 : vector<1x128xf32>
    %83 = arith.addf %78, %82 : vector<1x128xf32>
    %c15 = arith.constant 15 : index
    %84 = memref.load %arg1[%c15] : memref<32xf32, #tpu.memory_space<smem>>
    %85 = vector.extract_strided_slice %0 {offsets = [3, 0], sizes = [1, 128], strides = [1, 1]} : vector<8x128xf32> to vector<1x128xf32>
    %86 = vector.broadcast %84 : f32 to vector<1x128xf32>
    %87 = arith.mulf %86, %85 : vector<1x128xf32>
    %88 = arith.addf %83, %87 : vector<1x128xf32>
    %c4_6 = arith.constant 4 : index
    %89 = memref.load %arg2[%c4_6] : memref<8xf32, #tpu.memory_space<smem>>
    %c16 = arith.constant 16 : index
    %90 = memref.load %arg1[%c16] : memref<32xf32, #tpu.memory_space<smem>>
    %91 = vector.extract_strided_slice %0 {offsets = [4, 0], sizes = [1, 128], strides = [1, 1]} : vector<8x128xf32> to vector<1x128xf32>
    %92 = vector.broadcast %90 : f32 to vector<1x128xf32>
    %93 = arith.mulf %92, %91 : vector<1x128xf32>
    %94 = vector.broadcast %89 : f32 to vector<1x128xf32>
    %95 = arith.addf %94, %93 : vector<1x128xf32>
    %c17 = arith.constant 17 : index
    %96 = memref.load %arg1[%c17] : memref<32xf32, #tpu.memory_space<smem>>
    %97 = vector.extract_strided_slice %0 {offsets = [5, 0], sizes = [1, 128], strides = [1, 1]} : vector<8x128xf32> to vector<1x128xf32>
    %98 = vector.broadcast %96 : f32 to vector<1x128xf32>
    %99 = arith.mulf %98, %97 : vector<1x128xf32>
    %100 = arith.addf %95, %99 : vector<1x128xf32>
    %c18 = arith.constant 18 : index
    %101 = memref.load %arg1[%c18] : memref<32xf32, #tpu.memory_space<smem>>
    %102 = vector.extract_strided_slice %0 {offsets = [6, 0], sizes = [1, 128], strides = [1, 1]} : vector<8x128xf32> to vector<1x128xf32>
    %103 = vector.broadcast %101 : f32 to vector<1x128xf32>
    %104 = arith.mulf %103, %102 : vector<1x128xf32>
    %105 = arith.addf %100, %104 : vector<1x128xf32>
    %c19 = arith.constant 19 : index
    %106 = memref.load %arg1[%c19] : memref<32xf32, #tpu.memory_space<smem>>
    %107 = vector.extract_strided_slice %0 {offsets = [7, 0], sizes = [1, 128], strides = [1, 1]} : vector<8x128xf32> to vector<1x128xf32>
    %108 = vector.broadcast %106 : f32 to vector<1x128xf32>
    %109 = arith.mulf %108, %107 : vector<1x128xf32>
    %110 = arith.addf %105, %109 : vector<1x128xf32>
    %c5_7 = arith.constant 5 : index
    %111 = memref.load %arg2[%c5_7] : memref<8xf32, #tpu.memory_space<smem>>
    %c20 = arith.constant 20 : index
    %112 = memref.load %arg1[%c20] : memref<32xf32, #tpu.memory_space<smem>>
    %113 = vector.extract_strided_slice %0 {offsets = [4, 0], sizes = [1, 128], strides = [1, 1]} : vector<8x128xf32> to vector<1x128xf32>
    %114 = vector.broadcast %112 : f32 to vector<1x128xf32>
    %115 = arith.mulf %114, %113 : vector<1x128xf32>
    %116 = vector.broadcast %111 : f32 to vector<1x128xf32>
    %117 = arith.addf %116, %115 : vector<1x128xf32>
    %c21 = arith.constant 21 : index
    %118 = memref.load %arg1[%c21] : memref<32xf32, #tpu.memory_space<smem>>
    %119 = vector.extract_strided_slice %0 {offsets = [5, 0], sizes = [1, 128], strides = [1, 1]} : vector<8x128xf32> to vector<1x128xf32>
    %120 = vector.broadcast %118 : f32 to vector<1x128xf32>
    %121 = arith.mulf %120, %119 : vector<1x128xf32>
    %122 = arith.addf %117, %121 : vector<1x128xf32>
    %c22 = arith.constant 22 : index
    %123 = memref.load %arg1[%c22] : memref<32xf32, #tpu.memory_space<smem>>
    %124 = vector.extract_strided_slice %0 {offsets = [6, 0], sizes = [1, 128], strides = [1, 1]} : vector<8x128xf32> to vector<1x128xf32>
    %125 = vector.broadcast %123 : f32 to vector<1x128xf32>
    %126 = arith.mulf %125, %124 : vector<1x128xf32>
    %127 = arith.addf %122, %126 : vector<1x128xf32>
    %c23 = arith.constant 23 : index
    %128 = memref.load %arg1[%c23] : memref<32xf32, #tpu.memory_space<smem>>
    %129 = vector.extract_strided_slice %0 {offsets = [7, 0], sizes = [1, 128], strides = [1, 1]} : vector<8x128xf32> to vector<1x128xf32>
    %130 = vector.broadcast %128 : f32 to vector<1x128xf32>
    %131 = arith.mulf %130, %129 : vector<1x128xf32>
    %132 = arith.addf %127, %131 : vector<1x128xf32>
    %c6_8 = arith.constant 6 : index
    %133 = memref.load %arg2[%c6_8] : memref<8xf32, #tpu.memory_space<smem>>
    %c24 = arith.constant 24 : index
    %134 = memref.load %arg1[%c24] : memref<32xf32, #tpu.memory_space<smem>>
    %135 = vector.extract_strided_slice %0 {offsets = [4, 0], sizes = [1, 128], strides = [1, 1]} : vector<8x128xf32> to vector<1x128xf32>
    %136 = vector.broadcast %134 : f32 to vector<1x128xf32>
    %137 = arith.mulf %136, %135 : vector<1x128xf32>
    %138 = vector.broadcast %133 : f32 to vector<1x128xf32>
    %139 = arith.addf %138, %137 : vector<1x128xf32>
    %c25 = arith.constant 25 : index
    %140 = memref.load %arg1[%c25] : memref<32xf32, #tpu.memory_space<smem>>
    %141 = vector.extract_strided_slice %0 {offsets = [5, 0], sizes = [1, 128], strides = [1, 1]} : vector<8x128xf32> to vector<1x128xf32>
    %142 = vector.broadcast %140 : f32 to vector<1x128xf32>
    %143 = arith.mulf %142, %141 : vector<1x128xf32>
    %144 = arith.addf %139, %143 : vector<1x128xf32>
    %c26 = arith.constant 26 : index
    %145 = memref.load %arg1[%c26] : memref<32xf32, #tpu.memory_space<smem>>
    %146 = vector.extract_strided_slice %0 {offsets = [6, 0], sizes = [1, 128], strides = [1, 1]} : vector<8x128xf32> to vector<1x128xf32>
    %147 = vector.broadcast %145 : f32 to vector<1x128xf32>
    %148 = arith.mulf %147, %146 : vector<1x128xf32>
    %149 = arith.addf %144, %148 : vector<1x128xf32>
    %c27 = arith.constant 27 : index
    %150 = memref.load %arg1[%c27] : memref<32xf32, #tpu.memory_space<smem>>
    %151 = vector.extract_strided_slice %0 {offsets = [7, 0], sizes = [1, 128], strides = [1, 1]} : vector<8x128xf32> to vector<1x128xf32>
    %152 = vector.broadcast %150 : f32 to vector<1x128xf32>
    %153 = arith.mulf %152, %151 : vector<1x128xf32>
    %154 = arith.addf %149, %153 : vector<1x128xf32>
    %c7_9 = arith.constant 7 : index
    %155 = memref.load %arg2[%c7_9] : memref<8xf32, #tpu.memory_space<smem>>
    %c28 = arith.constant 28 : index
    %156 = memref.load %arg1[%c28] : memref<32xf32, #tpu.memory_space<smem>>
    %157 = vector.extract_strided_slice %0 {offsets = [4, 0], sizes = [1, 128], strides = [1, 1]} : vector<8x128xf32> to vector<1x128xf32>
    %158 = vector.broadcast %156 : f32 to vector<1x128xf32>
    %159 = arith.mulf %158, %157 : vector<1x128xf32>
    %160 = vector.broadcast %155 : f32 to vector<1x128xf32>
    %161 = arith.addf %160, %159 : vector<1x128xf32>
    %c29 = arith.constant 29 : index
    %162 = memref.load %arg1[%c29] : memref<32xf32, #tpu.memory_space<smem>>
    %163 = vector.extract_strided_slice %0 {offsets = [5, 0], sizes = [1, 128], strides = [1, 1]} : vector<8x128xf32> to vector<1x128xf32>
    %164 = vector.broadcast %162 : f32 to vector<1x128xf32>
    %165 = arith.mulf %164, %163 : vector<1x128xf32>
    %166 = arith.addf %161, %165 : vector<1x128xf32>
    %c30 = arith.constant 30 : index
    %167 = memref.load %arg1[%c30] : memref<32xf32, #tpu.memory_space<smem>>
    %168 = vector.extract_strided_slice %0 {offsets = [6, 0], sizes = [1, 128], strides = [1, 1]} : vector<8x128xf32> to vector<1x128xf32>
    %169 = vector.broadcast %167 : f32 to vector<1x128xf32>
    %170 = arith.mulf %169, %168 : vector<1x128xf32>
    %171 = arith.addf %166, %170 : vector<1x128xf32>
    %c31 = arith.constant 31 : index
    %172 = memref.load %arg1[%c31] : memref<32xf32, #tpu.memory_space<smem>>
    %173 = vector.extract_strided_slice %0 {offsets = [7, 0], sizes = [1, 128], strides = [1, 1]} : vector<8x128xf32> to vector<1x128xf32>
    %174 = vector.broadcast %172 : f32 to vector<1x128xf32>
    %175 = arith.mulf %174, %173 : vector<1x128xf32>
    %176 = arith.addf %171, %175 : vector<1x128xf32>
    %177 = tpu.concatenate %22, %44, %66, %88, %110, %132, %154, %176 in 0 : vector<1x128xf32>, vector<1x128xf32>, vector<1x128xf32>, vector<1x128xf32>, vector<1x128xf32>, vector<1x128xf32>, vector<1x128xf32>, vector<1x128xf32> -> vector<8x128xf32>
    %c0_10 = arith.constant 0 : index
    %c0_11 = arith.constant 0 : index
    %178 = vector.load %arg4[%c0_10, %c0_11] : memref<8x128xf32, #tpu.memory_space<vmem>>, vector<8x128xf32>
    tpu.vector_store %arg4[%c0_10, %c0_11], %177 {strides = array<i32>} : memref<8x128xf32, #tpu.memory_space<vmem>>, vector<8x128xf32>,
    return
  }
  func.func @transform_0(%arg0: i32) -> i32 {
    %c0_i32 = arith.constant 0 : i32
    %c0_i32_0 = arith.constant 0 : i32
    return %c0_i32 : i32
  }
  func.func @transform_1(%arg0: i32) -> i32 {
    %c0_i32 = arith.constant 0 : i32
    %c0_i32_0 = arith.constant 0 : i32
    return %c0_i32 : i32
  }
  func.func @transform_2(%arg0: i32) -> (i32, i32) {
    %c0_i32 = arith.constant 0 : i32
    %c0_i32_0 = arith.constant 0 : i32
    return %c0_i32, %arg0 : i32, i32
  }
  func.func @transform_3(%arg0: i32) -> (i32, i32) {
    %c0_i32 = arith.constant 0 : i32
    %c0_i32_0 = arith.constant 0 : i32
    return %c0_i32, %arg0 : i32, i32
  }
}

</mosaic_0001>

<llo_original>
// kernel: tpu_custom_call.1
$region0: #{tpu_custom_call.1}
  #allocation0 [shape = 'u32[]', space=smem, size = 0x4, offset = 0x4, fixed_abs, tag = 'smem constant byte address 0x4 - core index']
  #allocation1 [shape = 'u32[144,128]{1,0:T(1,128)}', space=vmem, size = 0x12000, scoped, tag = 'internal scratch']
  %s0 = inlined_call_operand.hbm [shape: f32[32], index: 0, kind: input, shape index: {}]
  %s1 = inlined_call_operand.vmem [shape: f32[8], index: 1, kind: input, shape index: {}]
  %s2 = inlined_call_operand.hbm [shape: f32[8,256], index: 2, kind: input, shape index: {}]
  %s3 = inlined_call_operand.hbm [shape: f32[8,256], index: 3, kind: output, shape index: {}]
  %s4 = sld [smem:[#allocation0]]
  $region57: #{tpu_custom_call.1} parent=0
    _
  %s6 = ssub.s32 1, %s4
  %s7 = scalar_select 0, %s6, %s4
  $region1: #{tpu_custom_call.1} parent=0
    #allocation2 [shape = 'u8[512]{0}', space=smem, size = 0x200, scoped, tag = 'input window, operand 0, single buffered']
    #allocation3 [shape = 's32[2]{0}', space=sflag, size = 0x8, scoped, tag = 'scoped memory for tpu_custom_call.1']
    #allocation4 [shape = 's32[2]{0}', space=sflag, size = 0x8, scoped, tag = 'scoped memory for tpu_custom_call.1']
    #allocation5 [shape = 's32[2]{0}', space=sflag, size = 0x8, scoped, tag = 'scoped memory for tpu_custom_call.1']
    #allocation6 [shape = 's32[2]{0}', space=sflag, size = 0x8, scoped, tag = 'scoped memory for tpu_custom_call.1']
    #allocation7 [shape = 'u8[512]{0}', space=smem, size = 0x200, scoped, tag = 'input window, operand 1, single buffered']
    #allocation8 [shape = 'u8[8192]{0}', space=vmem, size = 0x2000, scoped, tag = 'input window, operand 2']
    #allocation9 [shape = 'u8[8192]{0}', space=vmem, size = 0x2000, scoped, tag = 'output window, operand 0']
    %8 = vsyncpa [#allocation5], 0
    %9 = vsyncpa [#allocation6], 0
    %10 = vsyncpa [#allocation3], 0
    %s11 = scalar_lea.sflag [#allocation3], 1
    %12 = vsyncpa %s11, 0
    %13 = vsyncpa [#allocation4], 0
    %s14 = scalar_lea.sflag [#allocation4], 1
    %15 = vsyncpa %s14, 0
    loop: start=0, step=1, limit=4
    $region2: #{tpu_custom_call.1} parent=1 // loop_pre_header
      _
    $region3: #{tpu_custom_call.1} parent=1 // loop_header
      %s17 = sphi 0, %s21
      %p18 = scmp.ge.s32.totalorder %s17, 4
      %s25 = sphi 0, %s25
      %s27 = sphi 0, %s25
      %s28 = sphi 0, %s27
      %s42 = sphi 0, %s28
      %s46 = sphi 0, %s46
      %s48 = sphi 0, %s46
      %s49 = sphi 0, %s48
      %s63 = sphi 0, %s49
      %s69 = sphi 0, %s71
      %s72 = sphi 0, %s69
      %s73 = sphi 0, %s72
      %s89 = sphi 0, %s73
      %s95 = sphi 0, %s97
      %s98 = sphi 0, %s95
      %s99 = sphi 0, %s98
      %s115 = sphi 0, %s99
    $region4: #{tpu_custom_call.1} parent=1 // loop_header_branch
      %20 = sbr.rel (%p18) target = $region8
    $region5: #{tpu_custom_call.1} parent=1 // loop_body
      %s22 = ssub.s32 %s17, 1
      %s23 = ssub.s32 %s17, 2
      %s24 = sadd.s32 %s17, 1
      %s26 = sadd.s32 %s25, 1
      %p29 = scmp.eq.s32.totalorder %s17, 1
      %p30 = scmp.ne.s32.totalorder %s25, %s27
      %p31 = scmp.eq.s32.totalorder %s17, 0
      %p32 = por %p30, %p31
      %p33 = scmp.ne.s32.totalorder %s25, %s27
      %p34 = scmp.eq.s32.totalorder %s22, 1
      %p35 = por %p33, %p34
      %p36 = scmp.ne.s32.totalorder %s27, %s28
      %p37 = scmp.eq.s32.totalorder %s22, 0
      %p38 = por %p36, %p37
      %p39 = scmp.ne.s32.totalorder %s27, %s28
      %p40 = scmp.eq.s32.totalorder %s23, 1
      %p41 = por %p39, %p40
      %p43 = scmp.ne.s32.totalorder %s28, %s42
      %p44 = scmp.eq.s32.totalorder %s23, 0
      %p45 = por %p43, %p44
      %s47 = sadd.s32 %s46, 1
      %p50 = scmp.eq.s32.totalorder %s17, 1
      %p51 = scmp.ne.s32.totalorder %s46, %s48
      %p52 = scmp.eq.s32.totalorder %s17, 0
      %p53 = por %p51, %p52
      %p54 = scmp.ne.s32.totalorder %s46, %s48
      %p55 = scmp.eq.s32.totalorder %s22, 1
      %p56 = por %p54, %p55
      %p57 = scmp.ne.s32.totalorder %s48, %s49
      %p58 = scmp.eq.s32.totalorder %s22, 0
      %p59 = por %p57, %p58
      %p60 = scmp.ne.s32.totalorder %s48, %s49
      %p61 = scmp.eq.s32.totalorder %s23, 1
      %p62 = por %p60, %p61
      %p64 = scmp.ne.s32.totalorder %s49, %s63
      %p65 = scmp.eq.s32.totalorder %s23, 0
      %p66 = por %p64, %p65
      %s67 = ssub.s32 %s17, %s24
      %p68 = scmp.eq.s32.totalorder %s67, 0
      %s70 = sadd.s32 %s69, 1
      %s71 = scalar_select %p68, %s69, %s70
      %p74 = pneg %p68
      %p75 = scmp.eq.s32.totalorder %s17, 1
      %p76 = por %p74, %p75
      %p77 = scmp.ne.s32.totalorder %s69, %s72
      %p78 = scmp.eq.s32.totalorder %s17, 0
      %p79 = por %p77, %p78
      %p80 = scmp.ne.s32.totalorder %s69, %s72
      %p81 = scmp.eq.s32.totalorder %s22, 1
      %p82 = por %p80, %p81
      %p83 = scmp.ne.s32.totalorder %s72, %s73
      %p84 = scmp.eq.s32.totalorder %s22, 0
      %p85 = por %p83, %p84
      %p86 = scmp.ne.s32.totalorder %s72, %s73
      %p87 = scmp.eq.s32.totalorder %s23, 1
      %p88 = por %p86, %p87
      %p90 = scmp.ne.s32.totalorder %s73, %s89
      %p91 = scmp.eq.s32.totalorder %s23, 0
      %p92 = por %p90, %p91
      %s93 = ssub.s32 %s17, %s24
      %p94 = scmp.eq.s32.totalorder %s93, 0
      %s96 = sadd.s32 %s95, 1
      %s97 = scalar_select %p94, %s95, %s96
      %p100 = pneg %p94
      %p101 = scmp.eq.s32.totalorder %s17, 1
      %p102 = por %p100, %p101
      %p103 = scmp.ne.s32.totalorder %s95, %s98
      %p104 = scmp.eq.s32.totalorder %s17, 0
      %p105 = por %p103, %p104
      %p106 = scmp.ne.s32.totalorder %s95, %s98
      %p107 = scmp.eq.s32.totalorder %s22, 1
      %p108 = por %p106, %p107
      %p109 = scmp.ne.s32.totalorder %s98, %s99
      %p110 = scmp.eq.s32.totalorder %s22, 0
      %p111 = por %p109, %p110
      %p112 = scmp.ne.s32.totalorder %s98, %s99
      %p113 = scmp.eq.s32.totalorder %s23, 1
      %p114 = por %p112, %p113
      %p116 = scmp.ne.s32.totalorder %s99, %s115
      %p117 = scmp.eq.s32.totalorder %s23, 0
      %p118 = por %p116, %p117
      %p119 = scmp.le.s32.totalorder 1, %s17
      %p120 = scmp.lt.s32.totalorder %s17, 3
      %p121 = pnand %p119, %p120
      %p122 = pneg %p121
      // Predicated region
      $region9: #{tpu_custom_call.1} parent=5 // pred_check
        _
      $region10: #{tpu_custom_call.1} parent=5 // pred_check_branch
        %124 = sbr.rel (%p121) target = $region12
      $region11: #{tpu_custom_call.1} parent=5 // pred_region
        %s125 = ssub.s32 %s17, 1
        // Predicated region
        $region13: #{tpu_custom_call.1} parent=11 // pred_check
          %p126 = pneg %p38
        $region14: #{tpu_custom_call.1} parent=11 // pred_check_branch
          %128 = sbr.rel (%p126) target = $region16
        $region15: #{tpu_custom_call.1} parent=11 // pred_region
          %s130 = ssub.s32 16, 16
          %131 = vsyncadd [#allocation5], %s130
          %134 = dma.hbm_to_smem %s0, 16, [#allocation2], [#allocation5]
        $region16: #{tpu_custom_call.1} parent=11 // pred_fallthru
          _
        // Predicated region
        $region17: #{tpu_custom_call.1} parent=11 // pred_check
          %p135 = pneg %p59
        $region18: #{tpu_custom_call.1} parent=11 // pred_check_branch
          %137 = sbr.rel (%p135) target = $region20
        $region19: #{tpu_custom_call.1} parent=11 // pred_region
          %s139 = ssub.s32 16, 16
          %140 = vsyncadd [#allocation6], %s139
          %s142 = sshll.u32 %s1, 4
          %s143 = int_to_ptr.vmem [resolvable:$true] %s142
          %145 = dma.vmem_to_smem %s143, 16, [#allocation7], [#allocation6]
        $region20: #{tpu_custom_call.1} parent=11 // pred_fallthru
          _
      $region12: #{tpu_custom_call.1} parent=5 // pred_fallthru
        _
      %p146 = scmp.lt.s32.totalorder %s17, 2
      // Predicated region
      $region21: #{tpu_custom_call.1} parent=5 // pred_check
        %p147 = pneg %p146
      $region22: #{tpu_custom_call.1} parent=5 // pred_check_branch
        %149 = sbr.rel (%p147) target = $region24
      $region23: #{tpu_custom_call.1} parent=5 // pred_region
        // Predicated region
        $region25: #{tpu_custom_call.1} parent=23 // pred_check
          %p150 = pneg %p79
        $region26: #{tpu_custom_call.1} parent=23 // pred_check_branch
          %152 = sbr.rel (%p150) target = $region28
        $region27: #{tpu_custom_call.1} parent=23 // pred_region
          %s153 = sand.u32 %s69, 1
          %s154 = scalar_lea.sflag [#allocation3], %s153
          %s155 = sand.u32 %s69, 1
          %s156 = smul.addr %s155, 8
          %s157 = scalar_lea.vmem [#allocation8], %s156
          %s159 = ssub.s32 128, 128
          %160 = vsyncadd %s154, %s159
          %s161 = smul.addr %s17, 128
          %s162 = scalar_lea.hbm %s2, %s161
          %s164 = sshll.u32 %s157, 4
          %s165 = int_to_ptr.vmem [resolvable:$true] %s164
          %167 = dma.hbm_to_vmem [thread:$0]  %s162, 128, %s165, %s154
        $region28: #{tpu_custom_call.1} parent=23 // pred_fallthru
          _
      $region24: #{tpu_custom_call.1} parent=5 // pred_fallthru
        _
      %p168 = scmp.le.s32.totalorder 1, %s17
      %p169 = scmp.lt.s32.totalorder %s17, 3
      %p170 = pnand %p168, %p169
      %p171 = pneg %p170
      // Predicated region
      $region29: #{tpu_custom_call.1} parent=5 // pred_check
        _
      $region30: #{tpu_custom_call.1} parent=5 // pred_check_branch
        %173 = sbr.rel (%p170) target = $region32
      $region31: #{tpu_custom_call.1} parent=5 // pred_region
        %s174 = ssub.s32 %s17, 1
        // Predicated region
        $region33: #{tpu_custom_call.1} parent=31 // pred_check
          %p175 = pneg %p38
        $region34: #{tpu_custom_call.1} parent=31 // pred_check_branch
          %177 = sbr.rel (%p175) target = $region36
        $region35: #{tpu_custom_call.1} parent=31 // pred_region
          %178 = dma.done [#allocation5], 16
        $region36: #{tpu_custom_call.1} parent=31 // pred_fallthru
          _
        // Predicated region
        $region37: #{tpu_custom_call.1} parent=31 // pred_check
          %p179 = pneg %p59
        $region38: #{tpu_custom_call.1} parent=31 // pred_check_branch
          %181 = sbr.rel (%p179) target = $region40
        $region39: #{tpu_custom_call.1} parent=31 // pred_region
          %182 = dma.done [#allocation6], 16
        $region40: #{tpu_custom_call.1} parent=31 // pred_fallthru
          _
        %s183 = sand.u32 %s72, 1
        %s184 = scalar_lea.sflag [#allocation3], %s183
        %s185 = sand.u32 %s72, 1
        %s186 = smul.addr %s185, 8
        %s187 = scalar_lea.vmem [#allocation8], %s186
        // Predicated region
        $region41: #{tpu_custom_call.1} parent=31 // pred_check
          %p188 = pneg %p85
        $region42: #{tpu_custom_call.1} parent=31 // pred_check_branch
          %190 = sbr.rel (%p188) target = $region44
        $region43: #{tpu_custom_call.1} parent=31 // pred_region
          %191 = dma.done %s184, 128
        $region44: #{tpu_custom_call.1} parent=31 // pred_fallthru
          _
        %192 = sfence
        %p193 = pneg %p38
        %p194 = pneg %p35
        %p195 = pneg %p59
        %p196 = pneg %p56
        %s197 = sand.u32 %s72, 1
        %s198 = scalar_lea.sflag [#allocation3], %s197
        %s199 = sand.u32 %s72, 1
        %s200 = smul.addr %s199, 8
        %s201 = scalar_lea.vmem [#allocation8], %s200
        %p202 = pneg %p85
        %p203 = pneg %p82
        %p204 = pneg %p111
        %p205 = pneg %p108
        %s206 = sand.u32 %s98, 1
        %s207 = scalar_lea.sflag [#allocation4], %s206
        %s208 = sand.u32 %s98, 1
        %s209 = smul.addr %s208, 8
        %s210 = scalar_lea.vmem [#allocation9], %s209
        %v211 = vld [vmem:[%s187] sm:$0xff]
        %s212 = sld [smem:[#allocation7]]
        %s213 = sld [smem:[#allocation2]]
        %v214 = vstv %s213
        %v215 = vmul.f32 %v214, %v211
        %v216 = vstv %s212
        %v217 = vadd.f32 %v216, %v215
        %s218 = sld [smem:[#allocation2 + $0x1]]
        %v219 = vstv %s218
        %v220 = vmul.f32 %v219, %v211
        %v222 = vrot.slane %v220, 1
        %v224 = vadd.f32 %v217, %v222
        %s225 = sld [smem:[#allocation2 + $0x2]]
        %v226 = vstv %s225
        %v227 = vmul.f32 %v226, %v211
        %v229 = vrot.slane %v227, 2
        %v231 = vadd.f32 %v224, %v229
        %s232 = sld [smem:[#allocation2 + $0x3]]
        %v233 = vstv %s232
        %v234 = vmul.f32 %v233, %v211
        %v236 = vrot.slane %v234, 3
        %v238 = vadd.f32 %v231, %v236
        %s239 = sld [smem:[#allocation7 + $0x1]]
        %s240 = sld [smem:[#allocation2 + $0x4]]
        %v241 = vstv %s240
        %v242 = vmul.f32 %v241, %v211
        %v243 = vstv %s239
        %v244 = vadd.f32 %v243, %v242
        %s245 = sld [smem:[#allocation2 + $0x5]]
        %v246 = vstv %s245
        %v247 = vmul.f32 %v246, %v211
        %v249 = vrot.slane %v247, 1
        %v251 = vadd.f32 %v244, %v249
        %s252 = sld [smem:[#allocation2 + $0x6]]
        %v253 = vstv %s252
        %v254 = vmul.f32 %v253, %v211
        %v256 = vrot.slane %v254, 2
        %v258 = vadd.f32 %v251, %v256
        %s259 = sld [smem:[#allocation2 + $0x7]]
        %v260 = vstv %s259
        %v261 = vmul.f32 %v260, %v211
        %v263 = vrot.slane %v261, 3
        %v265 = vadd.f32 %v258, %v263
        %s266 = sld [smem:[#allocation7 + $0x2]]
        %s267 = sld [smem:[#allocation2 + $0x8]]
        %v268 = vstv %s267
        %v269 = vmul.f32 %v268, %v211
        %v270 = vstv %s266
        %v271 = vadd.f32 %v270, %v269
        %s272 = sld [smem:[#allocation2 + $0x9]]
        %v273 = vstv %s272
        %v274 = vmul.f32 %v273, %v211
        %v276 = vrot.slane %v274, 1
        %v278 = vadd.f32 %v271, %v276
        %s279 = sld [smem:[#allocation2 + $0xa]]
        %v280 = vstv %s279
        %v281 = vmul.f32 %v280, %v211
        %v283 = vrot.slane %v281, 2
        %v285 = vadd.f32 %v278, %v283
        %s286 = sld [smem:[#allocation2 + $0xb]]
        %v287 = vstv %s286
        %v288 = vmul.f32 %v287, %v211
        %v290 = vrot.slane %v288, 3
        %v292 = vadd.f32 %v285, %v290
        %s293 = sld [smem:[#allocation7 + $0x3]]
        %s294 = sld [smem:[#allocation2 + $0xc]]
        %v295 = vstv %s294
        %v296 = vmul.f32 %v295, %v211
        %v297 = vstv %s293
        %v298 = vadd.f32 %v297, %v296
        %s299 = sld [smem:[#allocation2 + $0xd]]
        %v300 = vstv %s299
        %v301 = vmul.f32 %v300, %v211
        %v303 = vrot.slane %v301, 1
        %v305 = vadd.f32 %v298, %v303
        %s306 = sld [smem:[#allocation2 + $0xe]]
        %v307 = vstv %s306
        %v308 = vmul.f32 %v307, %v211
        %v310 = vrot.slane %v308, 2
        %v312 = vadd.f32 %v305, %v310
        %s313 = sld [smem:[#allocation2 + $0xf]]
        %v314 = vstv %s313
        %v315 = vmul.f32 %v314, %v211
        %v317 = vrot.slane %v315, 3
        %v319 = vadd.f32 %v312, %v317
        %s320 = sld [smem:[#allocation7 + $0x4]]
        %s321 = sld [smem:[#allocation2 + $0x10]]
        %v322 = vstv %s321
        %v323 = vmul.f32 %v322, %v211
        %v324 = vstv %s320
        %v325 = vadd.f32 %v324, %v323
        %s326 = sld [smem:[#allocation2 + $0x11]]
        %v327 = vstv %s326
        %v328 = vmul.f32 %v327, %v211
        %v330 = vrot.slane %v328, 1
        %v332 = vadd.f32 %v325, %v330
        %s333 = sld [smem:[#allocation2 + $0x12]]
        %v334 = vstv %s333
        %v335 = vmul.f32 %v334, %v211
        %v337 = vrot.slane %v335, 2
        %v339 = vadd.f32 %v332, %v337
        %s340 = sld [smem:[#allocation2 + $0x13]]
        %v341 = vstv %s340
        %v342 = vmul.f32 %v341, %v211
        %v344 = vrot.slane %v342, 3
        %v346 = vadd.f32 %v339, %v344
        %s347 = sld [smem:[#allocation7 + $0x5]]
        %s348 = sld [smem:[#allocation2 + $0x14]]
        %v349 = vstv %s348
        %v350 = vmul.f32 %v349, %v211
        %v351 = vstv %s347
        %v352 = vadd.f32 %v351, %v350
        %s353 = sld [smem:[#allocation2 + $0x15]]
        %v354 = vstv %s353
        %v355 = vmul.f32 %v354, %v211
        %v357 = vrot.slane %v355, 1
        %v359 = vadd.f32 %v352, %v357
        %s360 = sld [smem:[#allocation2 + $0x16]]
        %v361 = vstv %s360
        %v362 = vmul.f32 %v361, %v211
        %v364 = vrot.slane %v362, 2
        %v366 = vadd.f32 %v359, %v364
        %s367 = sld [smem:[#allocation2 + $0x17]]
        %v368 = vstv %s367
        %v369 = vmul.f32 %v368, %v211
        %v371 = vrot.slane %v369, 3
        %v373 = vadd.f32 %v366, %v371
        %s374 = sld [smem:[#allocation7 + $0x6]]
        %s375 = sld [smem:[#allocation2 + $0x18]]
        %v376 = vstv %s375
        %v377 = vmul.f32 %v376, %v211
        %v378 = vstv %s374
        %v379 = vadd.f32 %v378, %v377
        %s380 = sld [smem:[#allocation2 + $0x19]]
        %v381 = vstv %s380
        %v382 = vmul.f32 %v381, %v211
        %v384 = vrot.slane %v382, 1
        %v386 = vadd.f32 %v379, %v384
        %s387 = sld [smem:[#allocation2 + $0x1a]]
        %v388 = vstv %s387
        %v389 = vmul.f32 %v388, %v211
        %v391 = vrot.slane %v389, 2
        %v393 = vadd.f32 %v386, %v391
        %s394 = sld [smem:[#allocation2 + $0x1b]]
        %v395 = vstv %s394
        %v396 = vmul.f32 %v395, %v211
        %v398 = vrot.slane %v396, 3
        %v400 = vadd.f32 %v393, %v398
        %s401 = sld [smem:[#allocation7 + $0x7]]
        %s402 = sld [smem:[#allocation2 + $0x1c]]
        %v403 = vstv %s402
        %v404 = vmul.f32 %v403, %v211
        %v405 = vstv %s401
        %v406 = vadd.f32 %v405, %v404
        %s407 = sld [smem:[#allocation2 + $0x1d]]
        %v408 = vstv %s407
        %v409 = vmul.f32 %v408, %v211
        %v411 = vrot.slane %v409, 1
        %v413 = vadd.f32 %v406, %v411
        %s414 = sld [smem:[#allocation2 + $0x1e]]
        %v415 = vstv %s414
        %v416 = vmul.f32 %v415, %v211
        %v418 = vrot.slane %v416, 2
        %v420 = vadd.f32 %v413, %v418
        %s421 = sld [smem:[#allocation2 + $0x1f]]
        %v422 = vstv %s421
        %v423 = vmul.f32 %v422, %v211
        %v425 = vrot.slane %v423, 3
        %v427 = vadd.f32 %v420, %v425
        %v429 = vrot.slane %v265, 7
        %v432 = vrot.slane %v292, 6
        %v435 = vrot.slane %v319, 5
        %v438 = vrot.slane %v373, 7
        %v441 = vrot.slane %v400, 6
        %v444 = vrot.slane %v427, 5
        %vm446 = vcmask 1040384
        %v447 = vsel %vm446, %v238, %v429
        %vm448 = vcmask 1041408
        %v449 = vsel %vm448, %v447, %v432
        %vm450 = vcmask 1042432
        %v451 = vsel %vm450, %v449, %v435
        %vm452 = vcmask 1043456
        %v453 = vsel %vm452, %v451, %v346
        %vm454 = vcmask 1044480
        %v455 = vsel %vm454, %v453, %v438
        %vm456 = vcmask 1045504
        %v457 = vsel %vm456, %v455, %v441
        %vm458 = vcmask 1046528
        %v459 = vsel %vm458, %v457, %v444
        %460 = vst [vmem:[%s210] sm:$0xff] %v459
        %s461 = sand.u32 %s98, 1
        %s462 = scalar_lea.sflag [#allocation4], %s461
        %s463 = sand.u32 %s98, 1
        %s464 = smul.addr %s463, 8
        %s465 = scalar_lea.vmem [#allocation9], %s464
        // Predicated region
        $region45: #{tpu_custom_call.1} parent=31 // pred_check
          %p466 = pneg %p108
        $region46: #{tpu_custom_call.1} parent=31 // pred_check_branch
          %468 = sbr.rel (%p466) target = $region48
        $region47: #{tpu_custom_call.1} parent=31 // pred_region
          %s470 = ssub.s32 128, 128
          %471 = vsyncadd %s462, %s470
          %s472 = smul.addr %s22, 128
          %s473 = scalar_lea.hbm %s3, %s472
          %s475 = sshll.u32 %s465, 4
          %s476 = int_to_ptr.vmem [resolvable:$true] %s475
          %478 = dma.vmem_to_hbm [thread:$0]  %s476, 128, %s473, %s462
        $region48: #{tpu_custom_call.1} parent=31 // pred_fallthru
          _
      $region32: #{tpu_custom_call.1} parent=5 // pred_fallthru
        _
      %p479 = scmp.le.s32.totalorder 2, %s17
      // Predicated region
      $region49: #{tpu_custom_call.1} parent=5 // pred_check
        %p480 = pneg %p479
      $region50: #{tpu_custom_call.1} parent=5 // pred_check_branch
        %482 = sbr.rel (%p480) target = $region52
      $region51: #{tpu_custom_call.1} parent=5 // pred_region
        %s483 = ssub.s32 %s17, 2
        // Predicated region
        $region53: #{tpu_custom_call.1} parent=51 // pred_check
          %p484 = pneg %p114
        $region54: #{tpu_custom_call.1} parent=51 // pred_check_branch
          %486 = sbr.rel (%p484) target = $region56
        $region55: #{tpu_custom_call.1} parent=51 // pred_region
          %s487 = sand.u32 %s99, 1
          %s488 = scalar_lea.sflag [#allocation4], %s487
          %s489 = sand.u32 %s99, 1
          %s490 = smul.addr %s489, 8
          %s491 = scalar_lea.vmem [#allocation9], %s490
          %492 = dma.done %s488, 128
        $region56: #{tpu_custom_call.1} parent=51 // pred_fallthru
          _
      $region52: #{tpu_custom_call.1} parent=5 // pred_fallthru
        _
    $region6: #{tpu_custom_call.1} parent=1 // loop_footer
      %s21 = sadd.s32 1, %s17
    $region7: #{tpu_custom_call.1} parent=1 // loop_footer_branch
      %16 = sbr.rel target = $region3
    $region8: #{tpu_custom_call.1} parent=1 // loop_exit
      _
    %493 = vsyncpa [#allocation3], 1
    %s494 = scalar_lea.sflag [#allocation3], 1
    %495 = vsyncpa %s494, 1
    %496 = vsyncpa [#allocation4], 1
    %s497 = scalar_lea.sflag [#allocation4], 1
    %498 = vsyncpa %s497, 1
    %499 = vsyncpa [#allocation5], 1
    %s500 = scalar_lea.sflag [#allocation5], 1
    %501 = vsyncpa %s500, 1
    %502 = vsyncpa [#allocation6], 1
    %s503 = scalar_lea.sflag [#allocation6], 1
    %504 = vsyncpa %s503, 1

</llo_original>
